<compile_context>
chip_gen: v7x
topology: tpu7x:2x2x1
jax: 0.10.0
libtpu: 0.0.40
codegen_flags: <defaults>
</compile_context>

<pallas_src>
import jax
import jax.numpy as jnp
from jax.experimental import pallas as pl
from jax.experimental.pallas import tpu as pltpu


def _head_matmul_kernel(x_ref, w_ref, b_ref, o_ref, acc_ref):
    # x_ref:   [B_TILE, K_TILE]   contiguous view of NCHW features (K = C*HW)
    # w_ref:   [K_TILE, N_PAD]    Linear weight with 1/HW pooling folded in
    # b_ref:   [1, N_PAD]         bias (zero-padded to 128 lanes)
    # o_ref:   [B_TILE, N_PAD]
    # acc_ref: [B_TILE, N_PAD]    f32 accumulator, resident across k axis
    @pl.when(pl.program_id(1) == 0)
    def _():
        acc_ref[...] = jnp.zeros_like(acc_ref)

    acc_ref[...] += jnp.dot(
        x_ref[...], w_ref[...], preferred_element_type=jnp.float32
    )

    @pl.when(pl.program_id(1) == pl.num_programs(1) - 1)
    def _():
        o_ref[...] = (acc_ref[...] + b_ref[...]).astype(o_ref.dtype)


def _pick_b_tile(B):
    # Second-to-last block dim must be a multiple of 8 OR equal the full extent.
    if B % 8 != 0:
        return B  # full-extent batch block (small / ragged batches)
    bt = 8
    while bt * 2 <= 64 and B % (bt * 2) == 0:
        bt *= 2
    return bt


def _pick_k_tile(K):
    # Last block dim of the feature tile must be a multiple of 128 (lanes)
    # or equal the full extent.
    for kt in (2048, 1024, 512, 256, 128):
        if K % kt == 0:
            return kt
    return K  # fall back to a full-extent block


def bacteria_head(feat_nchw, weight, bias):
    """feat_nchw: [B, C, H, W], weight: [N, C], bias: [N] -> [B, N] f32 logits."""
    B, C, H, W = feat_nchw.shape
    HW = H * W
    K = C * HW
    N = weight.shape[0]
    N_PAD = ((N + 127) // 128) * 128

    # Contiguous [B, C*HW] view of the NCHW features — no HBM transpose.
    feat2 = feat_nchw.reshape(B, K)

    # Fold AdaptiveAvgPool2d(1) into the Linear weight (built once; tiny & constant):
    #   out[b, n] = sum_{c,s} feat[b, c, s] * W[n, c] / HW + bias[n]
    w_fused = jnp.repeat(jnp.transpose(weight), HW, axis=0) * (1.0 / HW)  # [K, N]
    w_fused = jnp.pad(w_fused, ((0, 0), (0, N_PAD - N))).astype(feat2.dtype)
    b_pad = jnp.pad(bias.astype(jnp.float32), (0, N_PAD - N)).reshape(1, N_PAD)

    B_TILE = _pick_b_tile(B)
    K_TILE = _pick_k_tile(K)
    grid = (B // B_TILE, K // K_TILE)

    out = pl.pallas_call(
        _head_matmul_kernel,
        out_shape=jax.ShapeDtypeStruct((B, N_PAD), jnp.float32),
        grid_spec=pltpu.PrefetchScalarGridSpec(
            num_scalar_prefetch=0,
            grid=grid,
            in_specs=[
                pl.BlockSpec((B_TILE, K_TILE), lambda i, k: (i, k)),
                pl.BlockSpec((K_TILE, N_PAD), lambda i, k: (k, 0)),
                pl.BlockSpec((1, N_PAD), lambda i, k: (0, 0)),
            ],
            out_specs=pl.BlockSpec((B_TILE, N_PAD), lambda i, k: (i, 0)),
            scratch_shapes=[pltpu.VMEM((B_TILE, N_PAD), jnp.float32)],
        ),
        compiler_params=pltpu.CompilerParams(
            # Batch tiles are independent (megacore-shardable on v7x);
            # the contraction axis carries the accumulator -> "arbitrary", last.
            dimension_semantics=("parallel", "arbitrary"),
        ),
    )(feat2, w_fused, b_pad)

    return out[:, :N]


def reference_head(feat_nchw, weight, bias):
    """Pure-JAX reference mirroring the PyTorch head semantics."""
    pooled = jnp.mean(feat_nchw.astype(jnp.float32), axis=(2, 3))  # AvgPool + flatten
    return pooled @ weight.T.astype(jnp.float32) + bias            # nn.Linear


if __name__ == "__main__":
    key = jax.random.PRNGKey(0)
    k_feat, k_w, k_b = jax.random.split(key, 3)

    # Small, shape-consistent stand-ins:
    #   batch=2, dim_feats=128 (real se_resnext50 would be 2048), spatial 8x8,
    #   num_classes=16.
    B, C, H, W = 2, 128, 8, 8
    num_classes = 16

    feat = jax.random.normal(k_feat, (B, C, H, W), dtype=jnp.float32)
    # Deterministic Linear parameters (synthetic, not a checkpoint load).
    weight = jax.random.normal(k_w, (num_classes, C), dtype=jnp.float32) * 0.02
    bias = jax.random.normal(k_b, (num_classes,), dtype=jnp.float32) * 0.01

    out = bacteria_head(feat, weight, bias)
    out = jax.block_until_ready(out)

    ref = reference_head(feat, weight, bias)
    assert out.shape == (B, num_classes)
    assert jnp.allclose(out, ref, atol=1e-3, rtol=1e-3), "mismatch vs reference"

    print("KERNEL_OK")
</pallas_src>

<mosaic_0001>
module attributes {stable_mosaic.version = 11 : i64} {
  func.func @_head_matmul_kernel(%arg0: i32, %arg1: i32, %arg2: memref<2x2048xf32, #tpu.memory_space<vmem>>, %arg3: memref<2048x128xf32, #tpu.memory_space<vmem>>, %arg4: memref<1x128xf32, #tpu.memory_space<vmem>>, %arg5: memref<2x128xf32, #tpu.memory_space<vmem>>, %arg6: memref<2x128xf32, #tpu.memory_space<vmem>>) attributes {dimension_semantics = [#tpu.dimension_semantics<parallel>, #tpu.dimension_semantics<arbitrary>], iteration_bounds = array<i64: 1, 4>, scalar_prefetch = 0 : i64, scratch_operands = 1 : i64, tpu.core_type = #tpu.core_type<tc>, window_params = [{transform_indices = @transform_0, window_bounds = array<i64: 2, 2048>}, {transform_indices = @transform_1, window_bounds = array<i64: 2048, 128>}, {pipeline_mode = #tpu.pipeline_mode<synchronous>, transform_indices = @transform_2, window_bounds = array<i64: 1, 128>}, {transform_indices = @transform_3, window_bounds = array<i64: 2, 128>}]} {
    %c0_i32 = arith.constant 0 : i32
    %0 = arith.cmpi eq, %arg1, %c0_i32 : i32
    %1 = arith.extui %0 : i1 to i32
    %c0_i32_0 = arith.constant 0 : i32
    %2 = arith.cmpi ne, %1, %c0_i32_0 : i32
    scf.if %2 {
      %cst_9 = arith.constant 0.000000e+00 : f32
      %12 = vector.broadcast %cst_9 : f32 to vector<2x128xf32>
      %c0_10 = arith.constant 0 : index
      %c0_11 = arith.constant 0 : index
      %13 = vector.load %arg6[%c0_10, %c0_11] : memref<2x128xf32, #tpu.memory_space<vmem>>, vector<2x128xf32>
      tpu.vector_store %arg6[%c0_10, %c0_11], %12 {strides = array<i32>} : memref<2x128xf32, #tpu.memory_space<vmem>>, vector<2x128xf32>,
    } else {
    }
    %c0 = arith.constant 0 : index
    %c0_1 = arith.constant 0 : index
    %3 = vector.load %arg6[%c0, %c0_1] : memref<2x128xf32, #tpu.memory_space<vmem>>, vector<2x128xf32>
    %c0_2 = arith.constant 0 : index
    %c0_3 = arith.constant 0 : index
    %4 = vector.load %arg2[%c0_2, %c0_3] : memref<2x2048xf32, #tpu.memory_space<vmem>>, vector<2x2048xf32>
    %c0_4 = arith.constant 0 : index
    %c0_5 = arith.constant 0 : index
    %5 = vector.load %arg3[%c0_4, %c0_5] : memref<2048x128xf32, #tpu.memory_space<vmem>>, vector<2048x128xf32>
    %cst = arith.constant dense<0.000000e+00> : vector<2x128xf32>
    %6 = tpu.matmul %4, %5, %cst {dimension_numbers = #tpu.dot_dimension_numbers<[1], [0], [0], [1], [0, 0, 1, 1], [], []>} : vector<2x2048xf32>, vector<2048x128xf32>, vector<2x128xf32> -> vector<2x128xf32>
    %7 = arith.addf %3, %6 : vector<2x128xf32>
    %c0_6 = arith.constant 0 : index
    %c0_7 = arith.constant 0 : index
    %8 = vector.load %arg6[%c0_6, %c0_7] : memref<2x128xf32, #tpu.memory_space<vmem>>, vector<2x128xf32>
    tpu.vector_store %arg6[%c0_6, %c0_7], %7 {strides = array<i32>} : memref<2x128xf32, #tpu.memory_space<vmem>>, vector<2x128xf32>,
    %c3_i32 = arith.constant 3 : i32
    %9 = arith.cmpi eq, %arg1, %c3_i32 : i32
    %10 = arith.extui %9 : i1 to i32
    %c0_i32_8 = arith.constant 0 : i32
    %11 = arith.cmpi ne, %10, %c0_i32_8 : i32
    scf.if %11 {
      %c0_9 = arith.constant 0 : index
      %c0_10 = arith.constant 0 : index
      %12 = vector.load %arg6[%c0_9, %c0_10] : memref<2x128xf32, #tpu.memory_space<vmem>>, vector<2x128xf32>
      %c0_11 = arith.constant 0 : index
      %c0_12 = arith.constant 0 : index
      %13 = vector.load %arg4[%c0_11, %c0_12] : memref<1x128xf32, #tpu.memory_space<vmem>>, vector<1x128xf32>
      %14 = vector.broadcast %13 : vector<1x128xf32> to vector<2x128xf32>
      %15 = arith.addf %12, %14 : vector<2x128xf32>
      %c0_13 = arith.constant 0 : index
      %c0_14 = arith.constant 0 : index
      %16 = vector.load %arg5[%c0_13, %c0_14] : memref<2x128xf32, #tpu.memory_space<vmem>>, vector<2x128xf32>
      tpu.vector_store %arg5[%c0_13, %c0_14], %15 {strides = array<i32>} : memref<2x128xf32, #tpu.memory_space<vmem>>, vector<2x128xf32>,
    } else {
    }
    return
  }
  func.func @transform_0(%arg0: i32, %arg1: i32) -> (i32, i32) {
    %c0_i32 = arith.constant 0 : i32
    return %arg0, %arg1 : i32, i32
  }
  func.func @transform_1(%arg0: i32, %arg1: i32) -> (i32, i32) {
    %c0_i32 = arith.constant 0 : i32
    %c0_i32_0 = arith.constant 0 : i32
    return %arg1, %c0_i32 : i32, i32
  }
  func.func @transform_2(%arg0: i32, %arg1: i32) -> (i32, i32) {
    %c0_i32 = arith.constant 0 : i32
    %c0_i32_0 = arith.constant 0 : i32
    %c0_i32_1 = arith.constant 0 : i32
    return %c0_i32, %c0_i32_0 : i32, i32
  }
  func.func @transform_3(%arg0: i32, %arg1: i32) -> (i32, i32) {
    %c0_i32 = arith.constant 0 : i32
    %c0_i32_0 = arith.constant 0 : i32
    return %arg0, %c0_i32 : i32, i32
  }
}

</mosaic_0001>

<llo_original>
// kernel: tpu_custom_call.1
$region0: #{tpu_custom_call.1}
  #allocation0 [shape = 'u32[]', space=smem, size = 0x4, offset = 0x4, fixed_abs, tag = 'smem constant byte address 0x4 - core index']
  #allocation1 [shape = 'u32[144,128]{1,0:T(1,128)}', space=vmem, size = 0x12000, scoped, tag = 'internal scratch']
  #allocation2 [shape = 'f32[2,128]{1,0:T(2,128)}', space=vmem, size = 0x400, scoped, tag = 'scratch operand']
  %s0 = inlined_call_operand.hbm [shape: f32[2,8192], index: 0, kind: input, shape index: {}]
  %s1 = inlined_call_operand.hbm [shape: f32[8192,128], index: 1, kind: input, shape index: {}]
  %s2 = inlined_call_operand.hbm [shape: f32[1,128], index: 2, kind: input, shape index: {}]
  %s3 = inlined_call_operand.hbm [shape: f32[2,128], index: 3, kind: output, shape index: {}]
  %s4 = sld [smem:[#allocation0]]
  $region65: #{tpu_custom_call.1} parent=0
    _
  %s6 = ssub.s32 1, %s4
  %s7 = scalar_select 0, %s6, %s4
  $region1: #{tpu_custom_call.1} parent=0
    #allocation3 [shape = 'u8[32768]{0}', space=vmem, size = 0x8000, scoped, tag = 'input window, operand 0']
    #allocation4 [shape = 's32[2]{0}', space=sflag, size = 0x8, scoped, tag = 'scoped memory for tpu_custom_call.1']
    #allocation5 [shape = 's32[2]{0}', space=sflag, size = 0x8, scoped, tag = 'scoped memory for tpu_custom_call.1']
    #allocation6 [shape = 'u8[2097152]{0}', space=vmem, size = 0x200000, scoped, tag = 'input window, operand 1']
    #allocation7 [shape = 's32[2]{0}', space=sflag, size = 0x8, scoped, tag = 'scoped memory for tpu_custom_call.1']
    #allocation8 [shape = 'u8[512]{0}', space=vmem, size = 0x400, scoped, tag = 'input window, operand 2, single buffered']
    #allocation9 [shape = 'u8[1024]{0}', space=vmem, size = 0x400, scoped, tag = 'output window, operand 0, single buffered']
    %8 = vsyncpa [#allocation4], 0
    %s9 = scalar_lea.sflag [#allocation4], 1
    %10 = vsyncpa %s9, 0
    %11 = vsyncpa [#allocation7], 0
    %s12 = scalar_lea.sflag [#allocation7], 1
    %13 = vsyncpa %s12, 0
    %14 = vsyncpa [#allocation5], 0
    loop: start=0, step=1, limit=6
    $region2: #{tpu_custom_call.1} parent=1 // loop_pre_header
      _
    $region3: #{tpu_custom_call.1} parent=1 // loop_header
      %s16 = sphi 0, %s20
      %p17 = scmp.ge.s32.totalorder %s16, 6
      %s23 = sphi 0, %s35
      %s24 = sphi 0, %s31
      %s25 = sphi 0, %s23
      %s26 = sphi 0, %s24
      %s27 = sphi 0, %s25
      %s28 = sphi 0, %s26
      %s40 = sphi 0, %s42
      %s43 = sphi 0, %s40
      %s44 = sphi 0, %s43
      %s60 = sphi 0, %s44
      %s66 = sphi 0, %s68
      %s69 = sphi 0, %s66
      %s70 = sphi 0, %s69
      %s86 = sphi 0, %s70
      %s90 = sphi 0, %s90
      %s92 = sphi 0, %s90
      %s93 = sphi 0, %s92
      %s107 = sphi 0, %s93
      %s113 = sphi 0, %s115
      %s116 = sphi 0, %s113
      %s117 = sphi 0, %s116
      %s133 = sphi 0, %s117
    $region4: #{tpu_custom_call.1} parent=1 // loop_header_branch
      %19 = sbr.rel (%p17) target = $region8
    $region5: #{tpu_custom_call.1} parent=1 // loop_body
      %s21 = ssub.s32 %s16, 1
      %s22 = ssub.s32 %s16, 2
      %s29 = sadd.s32 1, %s24
      %p30 = scmp.ge.s32.totalorder %s29, 4
      %s31 = scalar_select %p30, 0, %s29
      %s32 = sadd.s32 1, %s23
      %s33 = scalar_select %p30, %s32, %s23
      %p34 = scmp.ge.s32.totalorder %s33, 1
      %s35 = scalar_select %p34, 0, %s33
      %s36 = ssub.s32 %s23, %s35
      %s37 = ssub.s32 %s24, %s31
      %s38 = sor.u32 %s36, %s37
      %p39 = scmp.eq.s32.totalorder %s38, 0
      %s41 = sadd.s32 %s40, 1
      %s42 = scalar_select %p39, %s40, %s41
      %p45 = pneg %p39
      %p46 = scmp.eq.s32.totalorder %s16, 3
      %p47 = por %p45, %p46
      %p48 = scmp.ne.s32.totalorder %s40, %s43
      %p49 = scmp.eq.s32.totalorder %s16, 0
      %p50 = por %p48, %p49
      %p51 = scmp.ne.s32.totalorder %s40, %s43
      %p52 = scmp.eq.s32.totalorder %s21, 3
      %p53 = por %p51, %p52
      %p54 = scmp.ne.s32.totalorder %s43, %s44
      %p55 = scmp.eq.s32.totalorder %s21, 0
      %p56 = por %p54, %p55
      %p57 = scmp.ne.s32.totalorder %s43, %s44
      %p58 = scmp.eq.s32.totalorder %s22, 3
      %p59 = por %p57, %p58
      %p61 = scmp.ne.s32.totalorder %s44, %s60
      %p62 = scmp.eq.s32.totalorder %s22, 0
      %p63 = por %p61, %p62
      %s64 = ssub.s32 %s24, %s31
      %p65 = scmp.eq.s32.totalorder %s64, 0
      %s67 = sadd.s32 %s66, 1
      %s68 = scalar_select %p65, %s66, %s67
      %p71 = pneg %p65
      %p72 = scmp.eq.s32.totalorder %s16, 3
      %p73 = por %p71, %p72
      %p74 = scmp.ne.s32.totalorder %s66, %s69
      %p75 = scmp.eq.s32.totalorder %s16, 0
      %p76 = por %p74, %p75
      %p77 = scmp.ne.s32.totalorder %s66, %s69
      %p78 = scmp.eq.s32.totalorder %s21, 3
      %p79 = por %p77, %p78
      %p80 = scmp.ne.s32.totalorder %s69, %s70
      %p81 = scmp.eq.s32.totalorder %s21, 0
      %p82 = por %p80, %p81
      %p83 = scmp.ne.s32.totalorder %s69, %s70
      %p84 = scmp.eq.s32.totalorder %s22, 3
      %p85 = por %p83, %p84
      %p87 = scmp.ne.s32.totalorder %s70, %s86
      %p88 = scmp.eq.s32.totalorder %s22, 0
      %p89 = por %p87, %p88
      %s91 = sadd.s32 %s90, 1
      %p94 = scmp.eq.s32.totalorder %s16, 3
      %p95 = scmp.ne.s32.totalorder %s90, %s92
      %p96 = scmp.eq.s32.totalorder %s16, 0
      %p97 = por %p95, %p96
      %p98 = scmp.ne.s32.totalorder %s90, %s92
      %p99 = scmp.eq.s32.totalorder %s21, 3
      %p100 = por %p98, %p99
      %p101 = scmp.ne.s32.totalorder %s92, %s93
      %p102 = scmp.eq.s32.totalorder %s21, 0
      %p103 = por %p101, %p102
      %p104 = scmp.ne.s32.totalorder %s92, %s93
      %p105 = scmp.eq.s32.totalorder %s22, 3
      %p106 = por %p104, %p105
      %p108 = scmp.ne.s32.totalorder %s93, %s107
      %p109 = scmp.eq.s32.totalorder %s22, 0
      %p110 = por %p108, %p109
      %s111 = ssub.s32 %s23, %s35
      %p112 = scmp.eq.s32.totalorder %s111, 0
      %s114 = sadd.s32 %s113, 1
      %s115 = scalar_select %p112, %s113, %s114
      %p118 = pneg %p112
      %p119 = scmp.eq.s32.totalorder %s16, 3
      %p120 = por %p118, %p119
      %p121 = scmp.ne.s32.totalorder %s113, %s116
      %p122 = scmp.eq.s32.totalorder %s16, 0
      %p123 = por %p121, %p122
      %p124 = scmp.ne.s32.totalorder %s113, %s116
      %p125 = scmp.eq.s32.totalorder %s21, 3
      %p126 = por %p124, %p125
      %p127 = scmp.ne.s32.totalorder %s116, %s117
      %p128 = scmp.eq.s32.totalorder %s21, 0
      %p129 = por %p127, %p128
      %p130 = scmp.ne.s32.totalorder %s116, %s117
      %p131 = scmp.eq.s32.totalorder %s22, 3
      %p132 = por %p130, %p131
      %p134 = scmp.ne.s32.totalorder %s117, %s133
      %p135 = scmp.eq.s32.totalorder %s22, 0
      %p136 = por %p134, %p135
      %p137 = scmp.le.s32.totalorder 1, %s16
      %p138 = scmp.lt.s32.totalorder %s16, 5
      %p139 = pnand %p137, %p138
      %p140 = pneg %p139
      // Predicated region
      $region9: #{tpu_custom_call.1} parent=5 // pred_check
        _
      $region10: #{tpu_custom_call.1} parent=5 // pred_check_branch
        %142 = sbr.rel (%p139) target = $region12
      $region11: #{tpu_custom_call.1} parent=5 // pred_region
        %s143 = ssub.s32 %s16, 1
        // Predicated region
        $region13: #{tpu_custom_call.1} parent=11 // pred_check
          %p144 = pneg %p103
        $region14: #{tpu_custom_call.1} parent=11 // pred_check_branch
          %146 = sbr.rel (%p144) target = $region16
        $region15: #{tpu_custom_call.1} parent=11 // pred_region
          %s148 = ssub.s32 16, 16
          %149 = vsyncadd [#allocation7], %s148
          %s151 = sshll.u32 [#allocation8], 4
          %s152 = int_to_ptr.vmem [resolvable:$true] %s151
          %154 = dma.hbm_to_vmem [thread:$0]  %s2, 16, %s152, [#allocation7]
        $region16: #{tpu_custom_call.1} parent=11 // pred_fallthru
          _
      $region12: #{tpu_custom_call.1} parent=5 // pred_fallthru
        _
      %p155 = scmp.lt.s32.totalorder %s16, 4
      // Predicated region
      $region17: #{tpu_custom_call.1} parent=5 // pred_check
        %p156 = pneg %p155
      $region18: #{tpu_custom_call.1} parent=5 // pred_check_branch
        %158 = sbr.rel (%p156) target = $region20
      $region19: #{tpu_custom_call.1} parent=5 // pred_region
        // Predicated region
        $region21: #{tpu_custom_call.1} parent=19 // pred_check
          %p159 = pneg %p50
        $region22: #{tpu_custom_call.1} parent=19 // pred_check_branch
          %161 = sbr.rel (%p159) target = $region24
        $region23: #{tpu_custom_call.1} parent=19 // pred_region
          %s162 = sand.u32 %s40, 1
          %s163 = scalar_lea.sflag [#allocation4], %s162
          %s164 = sand.u32 %s40, 1
          %s165 = smul.addr %s164, 32
          %s166 = scalar_lea.vmem [#allocation3], %s165
          %s167 = smul.u32 16, %s24
          %s169 = ssub.s32 512, 512
          %170 = vsyncadd %s163, %s169
          %s171 = smul.addr %s23, 64
          %s172 = sadd.s32 %s167, %s171
          %s173 = smul.addr %s172, 32
          %s174 = scalar_lea.hbm %s0, %s173
          %s176 = sshll.u32 %s166, 4
          %s177 = int_to_ptr.vmem [resolvable:$true] %s176
          %179 = dma.hbm_to_vmem [thread:$0]  %s174, 512, %s177, %s163
        $region24: #{tpu_custom_call.1} parent=19 // pred_fallthru
          _
        // Predicated region
        $region25: #{tpu_custom_call.1} parent=19 // pred_check
          %p180 = pneg %p76
        $region26: #{tpu_custom_call.1} parent=19 // pred_check_branch
          %182 = sbr.rel (%p180) target = $region28
        $region27: #{tpu_custom_call.1} parent=19 // pred_region
          %s183 = sand.u32 %s16, 1
          %s184 = scalar_lea.sflag [#allocation7], %s183
          %s185 = sand.u32 %s66, 1
          %s186 = smul.addr %s185, 2048
          %s187 = scalar_lea.vmem [#allocation6], %s186
          %s188 = smul.u32 256, %s24
          %s190 = ssub.s32 32768, 32768
          %191 = vsyncadd %s184, %s190
          %s192 = smul.addr %s188, 128
          %s193 = scalar_lea.hbm %s1, %s192
          %s194 = sshll.u32 %s187, 4
          %s195 = int_to_ptr.vmem [resolvable:$true] %s194
          %200 = dma.hbm_to_vmem [thread:$0]  %s193, 32768, %s195, %s184, 128, 128, 8
        $region28: #{tpu_custom_call.1} parent=19 // pred_fallthru
          _
      $region20: #{tpu_custom_call.1} parent=5 // pred_fallthru
        _
      %p201 = scmp.le.s32.totalorder 1, %s16
      %p202 = scmp.lt.s32.totalorder %s16, 5
      %p203 = pnand %p201, %p202
      %p204 = pneg %p203
      // Predicated region
      $region29: #{tpu_custom_call.1} parent=5 // pred_check
        _
      $region30: #{tpu_custom_call.1} parent=5 // pred_check_branch
        %206 = sbr.rel (%p203) target = $region32
      $region31: #{tpu_custom_call.1} parent=5 // pred_region
        %s207 = ssub.s32 %s16, 1
        %s208 = sand.u32 %s43, 1
        %s209 = scalar_lea.sflag [#allocation4], %s208
        %s210 = sand.u32 %s43, 1
        %s211 = smul.addr %s210, 32
        %s212 = scalar_lea.vmem [#allocation3], %s211
        // Predicated region
        $region33: #{tpu_custom_call.1} parent=31 // pred_check
          %p213 = pneg %p56
        $region34: #{tpu_custom_call.1} parent=31 // pred_check_branch
          %215 = sbr.rel (%p213) target = $region36
        $region35: #{tpu_custom_call.1} parent=31 // pred_region
          %216 = dma.done %s209, 512
        $region36: #{tpu_custom_call.1} parent=31 // pred_fallthru
          _
        %s217 = sand.u32 %s21, 1
        %s218 = scalar_lea.sflag [#allocation7], %s217
        %s219 = sand.u32 %s69, 1
        %s220 = smul.addr %s219, 2048
        %s221 = scalar_lea.vmem [#allocation6], %s220
        // Predicated region
        $region37: #{tpu_custom_call.1} parent=31 // pred_check
          %p222 = pneg %p82
        $region38: #{tpu_custom_call.1} parent=31 // pred_check_branch
          %224 = sbr.rel (%p222) target = $region40
        $region39: #{tpu_custom_call.1} parent=31 // pred_region
          %225 = dma.done %s218, 32768
        $region40: #{tpu_custom_call.1} parent=31 // pred_fallthru
          _
        // Predicated region
        $region41: #{tpu_custom_call.1} parent=31 // pred_check
          %p226 = pneg %p103
        $region42: #{tpu_custom_call.1} parent=31 // pred_check_branch
          %228 = sbr.rel (%p226) target = $region44
        $region43: #{tpu_custom_call.1} parent=31 // pred_region
          %229 = dma.done [#allocation7], 16
        $region44: #{tpu_custom_call.1} parent=31 // pred_fallthru
          _
        %s230 = sand.u32 %s43, 1
        %s231 = scalar_lea.sflag [#allocation4], %s230
        %s232 = sand.u32 %s43, 1
        %s233 = smul.addr %s232, 32
        %s234 = scalar_lea.vmem [#allocation3], %s233
        %p235 = pneg %p56
        %p236 = pneg %p53
        %s237 = sand.u32 %s21, 1
        %s238 = scalar_lea.sflag [#allocation7], %s237
        %s239 = sand.u32 %s69, 1
        %s240 = smul.addr %s239, 2048
        %s241 = scalar_lea.vmem [#allocation6], %s240
        %p242 = pneg %p82
        %p243 = pneg %p79
        %p244 = pneg %p103
        %p245 = pneg %p100
        %p246 = pneg %p129
        %p247 = pneg %p126
        %s248 = smul.u32 16, %s26
        %s249 = smul.u32 256, %s26
        %p250 = scmp.eq.s32.totalorder %s26, 0
        // Predicated region
        $region45: #{tpu_custom_call.1} parent=31 // pred_check
          %p251 = pneg %p250
        $region46: #{tpu_custom_call.1} parent=31 // pred_check_branch
          %253 = sbr.rel (%p251) target = $region48
        $region47: #{tpu_custom_call.1} parent=31 // pred_region
          %254 = vst [vmem:[#allocation2] sm:$0x3] 0.0
        $region48: #{tpu_custom_call.1} parent=31 // pred_fallthru
          _
        %v255 = vld [vmem:[#allocation2] sm:$0x3]
        %v256 = vld [vmem:[%s212] sm:$0xff]
        %v257 = vld [vmem:[%s212 + $0x8] sm:$0xff]
        %v258 = vld [vmem:[%s212 + $0x10] sm:$0xff]
        %v259 = vld [vmem:[%s212 + $0x18] sm:$0xff]
        %v260 = vld [vmem:[%s221] sm:$0xff]
        %v261 = vld [vmem:[%s221 + $0x8] sm:$0xff]
        %v262 = vld [vmem:[%s221 + $0x10] sm:$0xff]
        %v263 = vld [vmem:[%s221 + $0x18] sm:$0xff]
        %v264 = vld [vmem:[%s221 + $0x20] sm:$0xff]
        %v265 = vld [vmem:[%s221 + $0x28] sm:$0xff]
        %v266 = vld [vmem:[%s221 + $0x30] sm:$0xff]
        %v267 = vld [vmem:[%s221 + $0x38] sm:$0xff]
        %v268 = vld [vmem:[%s221 + $0x40] sm:$0xff]
        %v269 = vld [vmem:[%s221 + $0x48] sm:$0xff]
        %v270 = vld [vmem:[%s221 + $0x50] sm:$0xff]
        %v271 = vld [vmem:[%s221 + $0x58] sm:$0xff]
        %v272 = vld [vmem:[%s221 + $0x60] sm:$0xff]
        %v273 = vld [vmem:[%s221 + $0x68] sm:$0xff]
        %v274 = vld [vmem:[%s221 + $0x70] sm:$0xff]
        %v275 = vld [vmem:[%s221 + $0x78] sm:$0xff]
        %v276 = vld [vmem:[%s221 + $0x80] sm:$0xff]
        %v277 = vld [vmem:[%s221 + $0x88] sm:$0xff]
        %v278 = vld [vmem:[%s221 + $0x90] sm:$0xff]
        %v279 = vld [vmem:[%s221 + $0x98] sm:$0xff]
        %v280 = vld [vmem:[%s221 + $0xa0] sm:$0xff]
        %v281 = vld [vmem:[%s221 + $0xa8] sm:$0xff]
        %v282 = vld [vmem:[%s221 + $0xb0] sm:$0xff]
        %v283 = vld [vmem:[%s221 + $0xb8] sm:$0xff]
        %v284 = vld [vmem:[%s221 + $0xc0] sm:$0xff]
        %v285 = vld [vmem:[%s221 + $0xc8] sm:$0xff]
        %v286 = vld [vmem:[%s221 + $0xd0] sm:$0xff]
        %v287 = vld [vmem:[%s221 + $0xd8] sm:$0xff]
        %v288 = vld [vmem:[%s221 + $0xe0] sm:$0xff]
        %v289 = vld [vmem:[%s221 + $0xe8] sm:$0xff]
        %v290 = vld [vmem:[%s221 + $0xf0] sm:$0xff]
        %v291 = vld [vmem:[%s221 + $0xf8] sm:$0xff]
        %v292 = vld [vmem:[%s221 + $0x100] sm:$0xff]
        %v293 = vld [vmem:[%s221 + $0x108] sm:$0xff]
        %v294 = vld [vmem:[%s221 + $0x110] sm:$0xff]
        %v295 = vld [vmem:[%s221 + $0x118] sm:$0xff]
        %v296 = vld [vmem:[%s221 + $0x120] sm:$0xff]
        %v297 = vld [vmem:[%s221 + $0x128] sm:$0xff]
        %v298 = vld [vmem:[%s221 + $0x130] sm:$0xff]
        %v299 = vld [vmem:[%s221 + $0x138] sm:$0xff]
        %v300 = vld [vmem:[%s221 + $0x140] sm:$0xff]
        %v301 = vld [vmem:[%s221 + $0x148] sm:$0xff]
        %v302 = vld [vmem:[%s221 + $0x150] sm:$0xff]
        %v303 = vld [vmem:[%s221 + $0x158] sm:$0xff]
        %v304 = vld [vmem:[%s221 + $0x160] sm:$0xff]
        %v305 = vld [vmem:[%s221 + $0x168] sm:$0xff]
        %v306 = vld [vmem:[%s221 + $0x170] sm:$0xff]
        %v307 = vld [vmem:[%s221 + $0x178] sm:$0xff]
        %v308 = vld [vmem:[%s221 + $0x180] sm:$0xff]
        %v309 = vld [vmem:[%s221 + $0x188] sm:$0xff]
        %v310 = vld [vmem:[%s221 + $0x190] sm:$0xff]
        %v311 = vld [vmem:[%s221 + $0x198] sm:$0xff]
        %v312 = vld [vmem:[%s221 + $0x1a0] sm:$0xff]
        %v313 = vld [vmem:[%s221 + $0x1a8] sm:$0xff]
        %v314 = vld [vmem:[%s221 + $0x1b0] sm:$0xff]
        %v315 = vld [vmem:[%s221 + $0x1b8] sm:$0xff]
        %v316 = vld [vmem:[%s221 + $0x1c0] sm:$0xff]
        %v317 = vld [vmem:[%s221 + $0x1c8] sm:$0xff]
        %v318 = vld [vmem:[%s221 + $0x1d0] sm:$0xff]
        %v319 = vld [vmem:[%s221 + $0x1d8] sm:$0xff]
        %v320 = vld [vmem:[%s221 + $0x1e0] sm:$0xff]
        %v321 = vld [vmem:[%s221 + $0x1e8] sm:$0xff]
        %v322 = vld [vmem:[%s221 + $0x1f0] sm:$0xff]
        %v323 = vld [vmem:[%s221 + $0x1f8] sm:$0xff]
        %v324 = vld [vmem:[%s221 + $0x200] sm:$0xff]
        %v325 = vld [vmem:[%s221 + $0x208] sm:$0xff]
        %v326 = vld [vmem:[%s221 + $0x210] sm:$0xff]
        %v327 = vld [vmem:[%s221 + $0x218] sm:$0xff]
        %v328 = vld [vmem:[%s221 + $0x220] sm:$0xff]
        %v329 = vld [vmem:[%s221 + $0x228] sm:$0xff]
        %v330 = vld [vmem:[%s221 + $0x230] sm:$0xff]
        %v331 = vld [vmem:[%s221 + $0x238] sm:$0xff]
        %v332 = vld [vmem:[%s221 + $0x240] sm:$0xff]
        %v333 = vld [vmem:[%s221 + $0x248] sm:$0xff]
        %v334 = vld [vmem:[%s221 + $0x250] sm:$0xff]
        %v335 = vld [vmem:[%s221 + $0x258] sm:$0xff]
        %v336 = vld [vmem:[%s221 + $0x260] sm:$0xff]
        %v337 = vld [vmem:[%s221 + $0x268] sm:$0xff]
        %v338 = vld [vmem:[%s221 + $0x270] sm:$0xff]
        %v339 = vld [vmem:[%s221 + $0x278] sm:$0xff]
        %v340 = vld [vmem:[%s221 + $0x280] sm:$0xff]
        %v341 = vld [vmem:[%s221 + $0x288] sm:$0xff]
        %v342 = vld [vmem:[%s221 + $0x290] sm:$0xff]
        %v343 = vld [vmem:[%s221 + $0x298] sm:$0xff]
        %v344 = vld [vmem:[%s221 + $0x2a0] sm:$0xff]
        %v345 = vld [vmem:[%s221 + $0x2a8] sm:$0xff]
        %v346 = vld [vmem:[%s221 + $0x2b0] sm:$0xff]
        %v347 = vld [vmem:[%s221 + $0x2b8] sm:$0xff]
        %v348 = vld [vmem:[%s221 + $0x2c0] sm:$0xff]
        %v349 = vld [vmem:[%s221 + $0x2c8] sm:$0xff]
        %v350 = vld [vmem:[%s221 + $0x2d0] sm:$0xff]
        %v351 = vld [vmem:[%s221 + $0x2d8] sm:$0xff]
        %v352 = vld [vmem:[%s221 + $0x2e0] sm:$0xff]
        %v353 = vld [vmem:[%s221 + $0x2e8] sm:$0xff]
        %v354 = vld [vmem:[%s221 + $0x2f0] sm:$0xff]
        %v355 = vld [vmem:[%s221 + $0x2f8] sm:$0xff]
        %v356 = vld [vmem:[%s221 + $0x300] sm:$0xff]
        %v357 = vld [vmem:[%s221 + $0x308] sm:$0xff]
        %v358 = vld [vmem:[%s221 + $0x310] sm:$0xff]
        %v359 = vld [vmem:[%s221 + $0x318] sm:$0xff]
        %v360 = vld [vmem:[%s221 + $0x320] sm:$0xff]
        %v361 = vld [vmem:[%s221 + $0x328] sm:$0xff]
        %v362 = vld [vmem:[%s221 + $0x330] sm:$0xff]
        %v363 = vld [vmem:[%s221 + $0x338] sm:$0xff]
        %v364 = vld [vmem:[%s221 + $0x340] sm:$0xff]
        %v365 = vld [vmem:[%s221 + $0x348] sm:$0xff]
        %v366 = vld [vmem:[%s221 + $0x350] sm:$0xff]
        %v367 = vld [vmem:[%s221 + $0x358] sm:$0xff]
        %v368 = vld [vmem:[%s221 + $0x360] sm:$0xff]
        %v369 = vld [vmem:[%s221 + $0x368] sm:$0xff]
        %v370 = vld [vmem:[%s221 + $0x370] sm:$0xff]
        %v371 = vld [vmem:[%s221 + $0x378] sm:$0xff]
        %v372 = vld [vmem:[%s221 + $0x380] sm:$0xff]
        %v373 = vld [vmem:[%s221 + $0x388] sm:$0xff]
        %v374 = vld [vmem:[%s221 + $0x390] sm:$0xff]
        %v375 = vld [vmem:[%s221 + $0x398] sm:$0xff]
        %v376 = vld [vmem:[%s221 + $0x3a0] sm:$0xff]
        %v377 = vld [vmem:[%s221 + $0x3a8] sm:$0xff]
        %v378 = vld [vmem:[%s221 + $0x3b0] sm:$0xff]
        %v379 = vld [vmem:[%s221 + $0x3b8] sm:$0xff]
        %v380 = vld [vmem:[%s221 + $0x3c0] sm:$0xff]
        %v381 = vld [vmem:[%s221 + $0x3c8] sm:$0xff]
        %v382 = vld [vmem:[%s221 + $0x3d0] sm:$0xff]
        %v383 = vld [vmem:[%s221 + $0x3d8] sm:$0xff]
        %v384 = vld [vmem:[%s221 + $0x3e0] sm:$0xff]
        %v385 = vld [vmem:[%s221 + $0x3e8] sm:$0xff]
        %v386 = vld [vmem:[%s221 + $0x3f0] sm:$0xff]
        %v387 = vld [vmem:[%s221 + $0x3f8] sm:$0xff]
        %v388 = vld [vmem:[%s221 + $0x400] sm:$0xff]
        %v389 = vld [vmem:[%s221 + $0x408] sm:$0xff]
        %v390 = vld [vmem:[%s221 + $0x410] sm:$0xff]
        %v391 = vld [vmem:[%s221 + $0x418] sm:$0xff]
        %v392 = vld [vmem:[%s221 + $0x420] sm:$0xff]
        %v393 = vld [vmem:[%s221 + $0x428] sm:$0xff]
        %v394 = vld [vmem:[%s221 + $0x430] sm:$0xff]
        %v395 = vld [vmem:[%s221 + $0x438] sm:$0xff]
        %v396 = vld [vmem:[%s221 + $0x440] sm:$0xff]
        %v397 = vld [vmem:[%s221 + $0x448] sm:$0xff]
        %v398 = vld [vmem:[%s221 + $0x450] sm:$0xff]
        %v399 = vld [vmem:[%s221 + $0x458] sm:$0xff]
        %v400 = vld [vmem:[%s221 + $0x460] sm:$0xff]
        %v401 = vld [vmem:[%s221 + $0x468] sm:$0xff]
        %v402 = vld [vmem:[%s221 + $0x470] sm:$0xff]
        %v403 = vld [vmem:[%s221 + $0x478] sm:$0xff]
        %v404 = vld [vmem:[%s221 + $0x480] sm:$0xff]
        %v405 = vld [vmem:[%s221 + $0x488] sm:$0xff]
        %v406 = vld [vmem:[%s221 + $0x490] sm:$0xff]
        %v407 = vld [vmem:[%s221 + $0x498] sm:$0xff]
        %v408 = vld [vmem:[%s221 + $0x4a0] sm:$0xff]
        %v409 = vld [vmem:[%s221 + $0x4a8] sm:$0xff]
        %v410 = vld [vmem:[%s221 + $0x4b0] sm:$0xff]
        %v411 = vld [vmem:[%s221 + $0x4b8] sm:$0xff]
        %v412 = vld [vmem:[%s221 + $0x4c0] sm:$0xff]
        %v413 = vld [vmem:[%s221 + $0x4c8] sm:$0xff]
        %v414 = vld [vmem:[%s221 + $0x4d0] sm:$0xff]
        %v415 = vld [vmem:[%s221 + $0x4d8] sm:$0xff]
        %v416 = vld [vmem:[%s221 + $0x4e0] sm:$0xff]
        %v417 = vld [vmem:[%s221 + $0x4e8] sm:$0xff]
        %v418 = vld [vmem:[%s221 + $0x4f0] sm:$0xff]
        %v419 = vld [vmem:[%s221 + $0x4f8] sm:$0xff]
        %v420 = vld [vmem:[%s221 + $0x500] sm:$0xff]
        %v421 = vld [vmem:[%s221 + $0x508] sm:$0xff]
        %v422 = vld [vmem:[%s221 + $0x510] sm:$0xff]
        %v423 = vld [vmem:[%s221 + $0x518] sm:$0xff]
        %v424 = vld [vmem:[%s221 + $0x520] sm:$0xff]
        %v425 = vld [vmem:[%s221 + $0x528] sm:$0xff]
        %v426 = vld [vmem:[%s221 + $0x530] sm:$0xff]
        %v427 = vld [vmem:[%s221 + $0x538] sm:$0xff]
        %v428 = vld [vmem:[%s221 + $0x540] sm:$0xff]
        %v429 = vld [vmem:[%s221 + $0x548] sm:$0xff]
        %v430 = vld [vmem:[%s221 + $0x550] sm:$0xff]
        %v431 = vld [vmem:[%s221 + $0x558] sm:$0xff]
        %v432 = vld [vmem:[%s221 + $0x560] sm:$0xff]
        %v433 = vld [vmem:[%s221 + $0x568] sm:$0xff]
        %v434 = vld [vmem:[%s221 + $0x570] sm:$0xff]
        %v435 = vld [vmem:[%s221 + $0x578] sm:$0xff]
        %v436 = vld [vmem:[%s221 + $0x580] sm:$0xff]
        %v437 = vld [vmem:[%s221 + $0x588] sm:$0xff]
        %v438 = vld [vmem:[%s221 + $0x590] sm:$0xff]
        %v439 = vld [vmem:[%s221 + $0x598] sm:$0xff]
        %v440 = vld [vmem:[%s221 + $0x5a0] sm:$0xff]
        %v441 = vld [vmem:[%s221 + $0x5a8] sm:$0xff]
        %v442 = vld [vmem:[%s221 + $0x5b0] sm:$0xff]
        %v443 = vld [vmem:[%s221 + $0x5b8] sm:$0xff]
        %v444 = vld [vmem:[%s221 + $0x5c0] sm:$0xff]
        %v445 = vld [vmem:[%s221 + $0x5c8] sm:$0xff]
        %v446 = vld [vmem:[%s221 + $0x5d0] sm:$0xff]
        %v447 = vld [vmem:[%s221 + $0x5d8] sm:$0xff]
        %v448 = vld [vmem:[%s221 + $0x5e0] sm:$0xff]
        %v449 = vld [vmem:[%s221 + $0x5e8] sm:$0xff]
        %v450 = vld [vmem:[%s221 + $0x5f0] sm:$0xff]
        %v451 = vld [vmem:[%s221 + $0x5f8] sm:$0xff]
        %v452 = vld [vmem:[%s221 + $0x600] sm:$0xff]
        %v453 = vld [vmem:[%s221 + $0x608] sm:$0xff]
        %v454 = vld [vmem:[%s221 + $0x610] sm:$0xff]
        %v455 = vld [vmem:[%s221 + $0x618] sm:$0xff]
        %v456 = vld [vmem:[%s221 + $0x620] sm:$0xff]
        %v457 = vld [vmem:[%s221 + $0x628] sm:$0xff]
        %v458 = vld [vmem:[%s221 + $0x630] sm:$0xff]
        %v459 = vld [vmem:[%s221 + $0x638] sm:$0xff]
        %v460 = vld [vmem:[%s221 + $0x640] sm:$0xff]
        %v461 = vld [vmem:[%s221 + $0x648] sm:$0xff]
        %v462 = vld [vmem:[%s221 + $0x650] sm:$0xff]
        %v463 = vld [vmem:[%s221 + $0x658] sm:$0xff]
        %v464 = vld [vmem:[%s221 + $0x660] sm:$0xff]
        %v465 = vld [vmem:[%s221 + $0x668] sm:$0xff]
        %v466 = vld [vmem:[%s221 + $0x670] sm:$0xff]
        %v467 = vld [vmem:[%s221 + $0x678] sm:$0xff]
        %v468 = vld [vmem:[%s221 + $0x680] sm:$0xff]
        %v469 = vld [vmem:[%s221 + $0x688] sm:$0xff]
        %v470 = vld [vmem:[%s221 + $0x690] sm:$0xff]
        %v471 = vld [vmem:[%s221 + $0x698] sm:$0xff]
        %v472 = vld [vmem:[%s221 + $0x6a0] sm:$0xff]
        %v473 = vld [vmem:[%s221 + $0x6a8] sm:$0xff]
        %v474 = vld [vmem:[%s221 + $0x6b0] sm:$0xff]
        %v475 = vld [vmem:[%s221 + $0x6b8] sm:$0xff]
        %v476 = vld [vmem:[%s221 + $0x6c0] sm:$0xff]
        %v477 = vld [vmem:[%s221 + $0x6c8] sm:$0xff]
        %v478 = vld [vmem:[%s221 + $0x6d0] sm:$0xff]
        %v479 = vld [vmem:[%s221 + $0x6d8] sm:$0xff]
        %v480 = vld [vmem:[%s221 + $0x6e0] sm:$0xff]
        %v481 = vld [vmem:[%s221 + $0x6e8] sm:$0xff]
        %v482 = vld [vmem:[%s221 + $0x6f0] sm:$0xff]
        %v483 = vld [vmem:[%s221 + $0x6f8] sm:$0xff]
        %v484 = vld [vmem:[%s221 + $0x700] sm:$0xff]
        %v485 = vld [vmem:[%s221 + $0x708] sm:$0xff]
        %v486 = vld [vmem:[%s221 + $0x710] sm:$0xff]
        %v487 = vld [vmem:[%s221 + $0x718] sm:$0xff]
        %v488 = vld [vmem:[%s221 + $0x720] sm:$0xff]
        %v489 = vld [vmem:[%s221 + $0x728] sm:$0xff]
        %v490 = vld [vmem:[%s221 + $0x730] sm:$0xff]
        %v491 = vld [vmem:[%s221 + $0x738] sm:$0xff]
        %v492 = vld [vmem:[%s221 + $0x740] sm:$0xff]
        %v493 = vld [vmem:[%s221 + $0x748] sm:$0xff]
        %v494 = vld [vmem:[%s221 + $0x750] sm:$0xff]
        %v495 = vld [vmem:[%s221 + $0x758] sm:$0xff]
        %v496 = vld [vmem:[%s221 + $0x760] sm:$0xff]
        %v497 = vld [vmem:[%s221 + $0x768] sm:$0xff]
        %v498 = vld [vmem:[%s221 + $0x770] sm:$0xff]
        %v499 = vld [vmem:[%s221 + $0x778] sm:$0xff]
        %v500 = vld [vmem:[%s221 + $0x780] sm:$0xff]
        %v501 = vld [vmem:[%s221 + $0x788] sm:$0xff]
        %v502 = vld [vmem:[%s221 + $0x790] sm:$0xff]
        %v503 = vld [vmem:[%s221 + $0x798] sm:$0xff]
        %v504 = vld [vmem:[%s221 + $0x7a0] sm:$0xff]
        %v505 = vld [vmem:[%s221 + $0x7a8] sm:$0xff]
        %v506 = vld [vmem:[%s221 + $0x7b0] sm:$0xff]
        %v507 = vld [vmem:[%s221 + $0x7b8] sm:$0xff]
        %v508 = vld [vmem:[%s221 + $0x7c0] sm:$0xff]
        %v509 = vld [vmem:[%s221 + $0x7c8] sm:$0xff]
        %v510 = vld [vmem:[%s221 + $0x7d0] sm:$0xff]
        %v511 = vld [vmem:[%s221 + $0x7d8] sm:$0xff]
        %v512 = vld [vmem:[%s221 + $0x7e0] sm:$0xff]
        %v513 = vld [vmem:[%s221 + $0x7e8] sm:$0xff]
        %v514 = vld [vmem:[%s221 + $0x7f0] sm:$0xff]
        %v515 = vld [vmem:[%s221 + $0x7f8] sm:$0xff]
        %v520 = vcombine.high %v256, %v256
        %v522 = vunpack.c.l.s4 1983009808
        %v523 = vunpack.c.0.s8 %v522
        %v524 = vlaneseq
        %v525 = vshrl.u32 %v524, 7
        %v526 = vsub.s32 %v523, %v525
        %v527 = vrot.slane %v256, %v526
        %v529 = vunpack.c.l.s4 1983009808
        %v530 = vunpack.c.0.s8 %v529
        %v531 = vlaneseq
        %v532 = vshrl.u32 %v531, 7
        %v533 = vsub.s32 %v530, %v532
        %v534 = vrot.slane %v520, %v533
        %v535 = vcombine.high %v527, %v527
        %v536 = vcombine.high %v534, %v534
        %v537 = vcombine.high %v257, %v257
        %v539 = vunpack.c.l.s4 1983009808
        %v540 = vunpack.c.0.s8 %v539
        %v541 = vlaneseq
        %v542 = vshrl.u32 %v541, 7
        %v543 = vsub.s32 %v540, %v542
        %v544 = vrot.slane %v257, %v543
        %v546 = vunpack.c.l.s4 1983009808
        %v547 = vunpack.c.0.s8 %v546
        %v548 = vlaneseq
        %v549 = vshrl.u32 %v548, 7
        %v550 = vsub.s32 %v547, %v549
        %v551 = vrot.slane %v537, %v550
        %v552 = vcombine.high %v544, %v544
        %v553 = vcombine.high %v551, %v551
        %v554 = vcombine.high %v258, %v258
        %v556 = vunpack.c.l.s4 1983009808
        %v557 = vunpack.c.0.s8 %v556
        %v558 = vlaneseq
        %v559 = vshrl.u32 %v558, 7
        %v560 = vsub.s32 %v557, %v559
        %v561 = vrot.slane %v258, %v560
        %v563 = vunpack.c.l.s4 1983009808
        %v564 = vunpack.c.0.s8 %v563
        %v565 = vlaneseq
        %v566 = vshrl.u32 %v565, 7
        %v567 = vsub.s32 %v564, %v566
        %v568 = vrot.slane %v554, %v567
        %v569 = vcombine.high %v561, %v561
        %v570 = vcombine.high %v568, %v568
        %v571 = vcombine.high %v259, %v259
        %v573 = vunpack.c.l.s4 1983009808
        %v574 = vunpack.c.0.s8 %v573
        %v575 = vlaneseq
        %v576 = vshrl.u32 %v575, 7
        %v577 = vsub.s32 %v574, %v576
        %v578 = vrot.slane %v259, %v577
        %v580 = vunpack.c.l.s4 1983009808
        %v581 = vunpack.c.0.s8 %v580
        %v582 = vlaneseq
        %v583 = vshrl.u32 %v582, 7
        %v584 = vsub.s32 %v581, %v583
        %v585 = vrot.slane %v571, %v584
        %v586 = vcombine.high %v578, %v578
        %v587 = vcombine.high %v585, %v585
        %604 = vmatprep.subr.mxu0 0.0
        %605 = vmatpush1.msra.mxu0 %v260
        %606 = vmatprep.subr.mxu0 0.0
        %607 = vmatpush1.msra.mxu0 %v261
        %608 = vmatprep.subr.mxu0 0.0
        %609 = vmatpush1.msra.mxu0 %v262
        %610 = vmatprep.subr.mxu0 0.0
        %611 = vmatpush1.msra.mxu0 %v263
        %612 = vmatprep.subr.mxu0 0.0
        %613 = vmatpush1.msra.mxu0 %v264
        %614 = vmatprep.subr.mxu0 0.0
        %615 = vmatpush1.msra.mxu0 %v265
        %616 = vmatprep.subr.mxu0 0.0
        %617 = vmatpush1.msra.mxu0 %v266
        %618 = vmatprep.subr.mxu0 0.0
        %619 = vmatpush1.msra.mxu0 %v267
        %620 = vmatprep.subr.mxu0 0.0
        %621 = vmatpush1.msra.mxu0 %v268
        %622 = vmatprep.subr.mxu0 0.0
        %623 = vmatpush1.msra.mxu0 %v269
        %624 = vmatprep.subr.mxu0 0.0
        %625 = vmatpush1.msra.mxu0 %v270
        %626 = vmatprep.subr.mxu0 0.0
        %627 = vmatpush1.msra.mxu0 %v271
        %628 = vmatprep.subr.mxu0 0.0
        %629 = vmatpush1.msra.mxu0 %v272
        %630 = vmatprep.subr.mxu0 0.0
        %631 = vmatpush1.msra.mxu0 %v273
        %632 = vmatprep.subr.mxu0 0.0
        %633 = vmatpush1.msra.mxu0 %v274
        %634 = vmatprep.subr.mxu0 0.0
        %635 = vmatpush1.msra.mxu0 %v275
        %636 = vmatprep.subr.mxu0 0.0
        %637 = vmatpush1.msra.mxu0 %v276
        %638 = vmatprep.subr.mxu0 0.0
        %639 = vmatpush1.msra.mxu0 %v277
        %640 = vmatprep.subr.mxu0 0.0
        %641 = vmatpush1.msra.mxu0 %v278
        %642 = vmatprep.subr.mxu0 0.0
        %643 = vmatpush1.msra.mxu0 %v279
        %644 = vmatprep.subr.mxu0 0.0
        %645 = vmatpush1.msra.mxu0 %v280
        %646 = vmatprep.subr.mxu0 0.0
        %647 = vmatpush1.msra.mxu0 %v281
        %648 = vmatprep.subr.mxu0 0.0
        %649 = vmatpush1.msra.mxu0 %v282
        %650 = vmatprep.subr.mxu0 0.0
        %651 = vmatpush1.msra.mxu0 %v283
        %652 = vmatprep.subr.mxu0 0.0
        %653 = vmatpush1.msra.mxu0 %v284
        %654 = vmatprep.subr.mxu0 0.0
        %655 = vmatpush1.msra.mxu0 %v285
        %656 = vmatprep.subr.mxu0 0.0
        %657 = vmatpush1.msra.mxu0 %v286
        %658 = vmatprep.subr.mxu0 0.0
        %659 = vmatpush1.msra.mxu0 %v287
        %660 = vmatprep.subr.mxu0 0.0
        %661 = vmatpush1.msra.mxu0 %v288
        %662 = vmatprep.subr.mxu0 0.0
        %663 = vmatpush1.msra.mxu0 %v289
        %664 = vmatprep.subr.mxu0 0.0
        %665 = vmatpush1.msra.mxu0 %v290
        %666 = vmatprep.subr.mxu0 0.0
        %667 = vmatpush1.msra.mxu0 %v291
        %668 = vmatprep.mubr.f32.mxu0 %v535
        %669 = vmatmul.mubr.f32.gmra.mrb[0].mxu0 %v527
        %v670 = vpop.f32.mrb[0].mxu0
        %v671 = vadd.f32 0.0, %v670
        %v672 = vpop.f32.mrb[0].mxu0
        %673 = vdwg.mxu0
        %674 = vmatprep.subr.mxu0 0.0
        %675 = vmatpush1.msra.mxu0 %v292
        %676 = vmatprep.subr.mxu0 0.0
        %677 = vmatpush1.msra.mxu0 %v293
        %678 = vmatprep.subr.mxu0 0.0
        %679 = vmatpush1.msra.mxu0 %v294
        %680 = vmatprep.subr.mxu0 0.0
        %681 = vmatpush1.msra.mxu0 %v295
        %682 = vmatprep.subr.mxu0 0.0
        %683 = vmatpush1.msra.mxu0 %v296
        %684 = vmatprep.subr.mxu0 0.0
        %685 = vmatpush1.msra.mxu0 %v297
        %686 = vmatprep.subr.mxu0 0.0
        %687 = vmatpush1.msra.mxu0 %v298
        %688 = vmatprep.subr.mxu0 0.0
        %689 = vmatpush1.msra.mxu0 %v299
        %690 = vmatprep.subr.mxu0 0.0
        %691 = vmatpush1.msra.mxu0 %v300
        %692 = vmatprep.subr.mxu0 0.0
        %693 = vmatpush1.msra.mxu0 %v301
        %694 = vmatprep.subr.mxu0 0.0
        %695 = vmatpush1.msra.mxu0 %v302
        %696 = vmatprep.subr.mxu0 0.0
        %697 = vmatpush1.msra.mxu0 %v303
        %698 = vmatprep.subr.mxu0 0.0
        %699 = vmatpush1.msra.mxu0 %v304
        %700 = vmatprep.subr.mxu0 0.0
        %701 = vmatpush1.msra.mxu0 %v305
        %702 = vmatprep.subr.mxu0 0.0
        %703 = vmatpush1.msra.mxu0 %v306
        %704 = vmatprep.subr.mxu0 0.0
        %705 = vmatpush1.msra.mxu0 %v307
        %706 = vmatprep.subr.mxu0 0.0
        %707 = vmatpush1.msra.mxu0 %v308
        %708 = vmatprep.subr.mxu0 0.0
        %709 = vmatpush1.msra.mxu0 %v309
        %710 = vmatprep.subr.mxu0 0.0
        %711 = vmatpush1.msra.mxu0 %v310
        %712 = vmatprep.subr.mxu0 0.0
        %713 = vmatpush1.msra.mxu0 %v311
        %714 = vmatprep.subr.mxu0 0.0
        %715 = vmatpush1.msra.mxu0 %v312
        %716 = vmatprep.subr.mxu0 0.0
        %717 = vmatpush1.msra.mxu0 %v313
        %718 = vmatprep.subr.mxu0 0.0
        %719 = vmatpush1.msra.mxu0 %v314
        %720 = vmatprep.subr.mxu0 0.0
        %721 = vmatpush1.msra.mxu0 %v315
        %722 = vmatprep.subr.mxu0 0.0
        %723 = vmatpush1.msra.mxu0 %v316
        %724 = vmatprep.subr.mxu0 0.0
        %725 = vmatpush1.msra.mxu0 %v317
        %726 = vmatprep.subr.mxu0 0.0
        %727 = vmatpush1.msra.mxu0 %v318
        %728 = vmatprep.subr.mxu0 0.0
        %729 = vmatpush1.msra.mxu0 %v319
        %730 = vmatprep.subr.mxu0 0.0
        %731 = vmatpush1.msra.mxu0 %v320
        %732 = vmatprep.subr.mxu0 0.0
        %733 = vmatpush1.msra.mxu0 %v321
        %734 = vmatprep.subr.mxu0 0.0
        %735 = vmatpush1.msra.mxu0 %v322
        %736 = vmatprep.subr.mxu0 0.0
        %737 = vmatpush1.msra.mxu0 %v323
        %738 = vmatprep.mubr.f32.mxu0 %v536
        %739 = vmatmul.mubr.f32.gmra.mrb[0].mxu0 %v534
        %v740 = vpop.f32.mrb[0].mxu0
        %v741 = vadd.f32 %v671, %v740
        %v742 = vpop.f32.mrb[0].mxu0
        %743 = vdwg.mxu0
        %744 = vmatprep.subr.mxu0 0.0
        %745 = vmatpush1.msra.mxu0 %v324
        %746 = vmatprep.subr.mxu0 0.0
        %747 = vmatpush1.msra.mxu0 %v325
        %748 = vmatprep.subr.mxu0 0.0
        %749 = vmatpush1.msra.mxu0 %v326
        %750 = vmatprep.subr.mxu0 0.0
        %751 = vmatpush1.msra.mxu0 %v327
        %752 = vmatprep.subr.mxu0 0.0
        %753 = vmatpush1.msra.mxu0 %v328
        %754 = vmatprep.subr.mxu0 0.0
        %755 = vmatpush1.msra.mxu0 %v329
        %756 = vmatprep.subr.mxu0 0.0
        %757 = vmatpush1.msra.mxu0 %v330
        %758 = vmatprep.subr.mxu0 0.0
        %759 = vmatpush1.msra.mxu0 %v331
        %760 = vmatprep.subr.mxu0 0.0
        %761 = vmatpush1.msra.mxu0 %v332
        %762 = vmatprep.subr.mxu0 0.0
        %763 = vmatpush1.msra.mxu0 %v333
        %764 = vmatprep.subr.mxu0 0.0
        %765 = vmatpush1.msra.mxu0 %v334
        %766 = vmatprep.subr.mxu0 0.0
        %767 = vmatpush1.msra.mxu0 %v335
        %768 = vmatprep.subr.mxu0 0.0
        %769 = vmatpush1.msra.mxu0 %v336
        %770 = vmatprep.subr.mxu0 0.0
        %771 = vmatpush1.msra.mxu0 %v337
        %772 = vmatprep.subr.mxu0 0.0
        %773 = vmatpush1.msra.mxu0 %v338
        %774 = vmatprep.subr.mxu0 0.0
        %775 = vmatpush1.msra.mxu0 %v339
        %776 = vmatprep.subr.mxu0 0.0
        %777 = vmatpush1.msra.mxu0 %v340
        %778 = vmatprep.subr.mxu0 0.0
        %779 = vmatpush1.msra.mxu0 %v341
        %780 = vmatprep.subr.mxu0 0.0
        %781 = vmatpush1.msra.mxu0 %v342
        %782 = vmatprep.subr.mxu0 0.0
        %783 = vmatpush1.msra.mxu0 %v343
        %784 = vmatprep.subr.mxu0 0.0
        %785 = vmatpush1.msra.mxu0 %v344
        %786 = vmatprep.subr.mxu0 0.0
        %787 = vmatpush1.msra.mxu0 %v345
        %788 = vmatprep.subr.mxu0 0.0
        %789 = vmatpush1.msra.mxu0 %v346
        %790 = vmatprep.subr.mxu0 0.0
        %791 = vmatpush1.msra.mxu0 %v347
        %792 = vmatprep.subr.mxu0 0.0
        %793 = vmatpush1.msra.mxu0 %v348
        %794 = vmatprep.subr.mxu0 0.0
        %795 = vmatpush1.msra.mxu0 %v349
        %796 = vmatprep.subr.mxu0 0.0
        %797 = vmatpush1.msra.mxu0 %v350
        %798 = vmatprep.subr.mxu0 0.0
        %799 = vmatpush1.msra.mxu0 %v351
        %800 = vmatprep.subr.mxu0 0.0
        %801 = vmatpush1.msra.mxu0 %v352
        %802 = vmatprep.subr.mxu0 0.0
        %803 = vmatpush1.msra.mxu0 %v353
        %804 = vmatprep.subr.mxu0 0.0
        %805 = vmatpush1.msra.mxu0 %v354
        %806 = vmatprep.subr.mxu0 0.0
        %807 = vmatpush1.msra.mxu0 %v355
        %808 = vmatprep.mubr.f32.mxu0 %v552
        %809 = vmatmul.mubr.f32.gmra.mrb[0].mxu0 %v544
        %v810 = vpop.f32.mrb[0].mxu0
        %v811 = vadd.f32 %v741, %v810
        %v812 = vpop.f32.mrb[0].mxu0
        %813 = vdwg.mxu0
        %814 = vmatprep.subr.mxu0 0.0
        %815 = vmatpush1.msra.mxu0 %v356
        %816 = vmatprep.subr.mxu0 0.0
        %817 = vmatpush1.msra.mxu0 %v357
        %818 = vmatprep.subr.mxu0 0.0
        %819 = vmatpush1.msra.mxu0 %v358
        %820 = vmatprep.subr.mxu0 0.0
        %821 = vmatpush1.msra.mxu0 %v359
        %822 = vmatprep.subr.mxu0 0.0
        %823 = vmatpush1.msra.mxu0 %v360
        %824 = vmatprep.subr.mxu0 0.0
        %825 = vmatpush1.msra.mxu0 %v361
        %826 = vmatprep.subr.mxu0 0.0
        %827 = vmatpush1.msra.mxu0 %v362
        %828 = vmatprep.subr.mxu0 0.0
        %829 = vmatpush1.msra.mxu0 %v363
        %830 = vmatprep.subr.mxu0 0.0
        %831 = vmatpush1.msra.mxu0 %v364
        %832 = vmatprep.subr.mxu0 0.0
        %833 = vmatpush1.msra.mxu0 %v365
        %834 = vmatprep.subr.mxu0 0.0
        %835 = vmatpush1.msra.mxu0 %v366
        %836 = vmatprep.subr.mxu0 0.0
        %837 = vmatpush1.msra.mxu0 %v367
        %838 = vmatprep.subr.mxu0 0.0
        %839 = vmatpush1.msra.mxu0 %v368
        %840 = vmatprep.subr.mxu0 0.0
        %841 = vmatpush1.msra.mxu0 %v369
        %842 = vmatprep.subr.mxu0 0.0
        %843 = vmatpush1.msra.mxu0 %v370
        %844 = vmatprep.subr.mxu0 0.0
        %845 = vmatpush1.msra.mxu0 %v371
        %846 = vmatprep.subr.mxu0 0.0
        %847 = vmatpush1.msra.mxu0 %v372
        %848 = vmatprep.subr.mxu0 0.0
        %849 = vmatpush1.msra.mxu0 %v373
        %850 = vmatprep.subr.mxu0 0.0
        %851 = vmatpush1.msra.mxu0 %v374
        %852 = vmatprep.subr.mxu0 0.0
        %853 = vmatpush1.msra.mxu0 %v375
        %854 = vmatprep.subr.mxu0 0.0
        %855 = vmatpush1.msra.mxu0 %v376
        %856 = vmatprep.subr.mxu0 0.0
        %857 = vmatpush1.msra.mxu0 %v377
        %858 = vmatprep.subr.mxu0 0.0
        %859 = vmatpush1.msra.mxu0 %v378
        %860 = vmatprep.subr.mxu0 0.0
        %861 = vmatpush1.msra.mxu0 %v379
        %862 = vmatprep.subr.mxu0 0.0
        %863 = vmatpush1.msra.mxu0 %v380
        %864 = vmatprep.subr.mxu0 0.0
        %865 = vmatpush1.msra.mxu0 %v381
        %866 = vmatprep.subr.mxu0 0.0
        %867 = vmatpush1.msra.mxu0 %v382
        %868 = vmatprep.subr.mxu0 0.0
        %869 = vmatpush1.msra.mxu0 %v383
        %870 = vmatprep.subr.mxu0 0.0
        %871 = vmatpush1.msra.mxu0 %v384
        %872 = vmatprep.subr.mxu0 0.0
        %873 = vmatpush1.msra.mxu0 %v385
        %874 = vmatprep.subr.mxu0 0.0
        %875 = vmatpush1.msra.mxu0 %v386
        %876 = vmatprep.subr.mxu0 0.0
        %877 = vmatpush1.msra.mxu0 %v387
        %878 = vmatprep.mubr.f32.mxu0 %v553
        %879 = vmatmul.mubr.f32.gmra.mrb[0].mxu0 %v551
        %v880 = vpop.f32.mrb[0].mxu0
        %v881 = vadd.f32 %v811, %v880
        %v882 = vpop.f32.mrb[0].mxu0
        %883 = vdwg.mxu0
        %884 = vmatprep.subr.mxu0 0.0
        %885 = vmatpush1.msra.mxu0 %v388
        %886 = vmatprep.subr.mxu0 0.0
        %887 = vmatpush1.msra.mxu0 %v389
        %888 = vmatprep.subr.mxu0 0.0
        %889 = vmatpush1.msra.mxu0 %v390
        %890 = vmatprep.subr.mxu0 0.0
        %891 = vmatpush1.msra.mxu0 %v391
        %892 = vmatprep.subr.mxu0 0.0
        %893 = vmatpush1.msra.mxu0 %v392
        %894 = vmatprep.subr.mxu0 0.0
        %895 = vmatpush1.msra.mxu0 %v393
        %896 = vmatprep.subr.mxu0 0.0
        %897 = vmatpush1.msra.mxu0 %v394
        %898 = vmatprep.subr.mxu0 0.0
        %899 = vmatpush1.msra.mxu0 %v395
        %900 = vmatprep.subr.mxu0 0.0
        %901 = vmatpush1.msra.mxu0 %v396
        %902 = vmatprep.subr.mxu0 0.0
        %903 = vmatpush1.msra.mxu0 %v397
        %904 = vmatprep.subr.mxu0 0.0
        %905 = vmatpush1.msra.mxu0 %v398
        %906 = vmatprep.subr.mxu0 0.0
        %907 = vmatpush1.msra.mxu0 %v399
        %908 = vmatprep.subr.mxu0 0.0
        %909 = vmatpush1.msra.mxu0 %v400
        %910 = vmatprep.subr.mxu0 0.0
        %911 = vmatpush1.msra.mxu0 %v401
        %912 = vmatprep.subr.mxu0 0.0
        %913 = vmatpush1.msra.mxu0 %v402
        %914 = vmatprep.subr.mxu0 0.0
        %915 = vmatpush1.msra.mxu0 %v403
        %916 = vmatprep.subr.mxu0 0.0
        %917 = vmatpush1.msra.mxu0 %v404
        %918 = vmatprep.subr.mxu0 0.0
        %919 = vmatpush1.msra.mxu0 %v405
        %920 = vmatprep.subr.mxu0 0.0
        %921 = vmatpush1.msra.mxu0 %v406
        %922 = vmatprep.subr.mxu0 0.0
        %923 = vmatpush1.msra.mxu0 %v407
        %924 = vmatprep.subr.mxu0 0.0
        %925 = vmatpush1.msra.mxu0 %v408
        %926 = vmatprep.subr.mxu0 0.0
        %927 = vmatpush1.msra.mxu0 %v409
        %928 = vmatprep.subr.mxu0 0.0
        %929 = vmatpush1.msra.mxu0 %v410
        %930 = vmatprep.subr.mxu0 0.0
        %931 = vmatpush1.msra.mxu0 %v411
        %932 = vmatprep.subr.mxu0 0.0
        %933 = vmatpush1.msra.mxu0 %v412
        %934 = vmatprep.subr.mxu0 0.0
        %935 = vmatpush1.msra.mxu0 %v413
        %936 = vmatprep.subr.mxu0 0.0
        %937 = vmatpush1.msra.mxu0 %v414
        %938 = vmatprep.subr.mxu0 0.0
        %939 = vmatpush1.msra.mxu0 %v415
        %940 = vmatprep.subr.mxu0 0.0
        %941 = vmatpush1.msra.mxu0 %v416
        %942 = vmatprep.subr.mxu0 0.0
        %943 = vmatpush1.msra.mxu0 %v417
        %944 = vmatprep.subr.mxu0 0.0
        %945 = vmatpush1.msra.mxu0 %v418
        %946 = vmatprep.subr.mxu0 0.0
        %947 = vmatpush1.msra.mxu0 %v419
        %948 = vmatprep.mubr.f32.mxu0 %v569
        %949 = vmatmul.mubr.f32.gmra.mrb[0].mxu0 %v561
        %v950 = vpop.f32.mrb[0].mxu0
        %v951 = vadd.f32 %v881, %v950
        %v952 = vpop.f32.mrb[0].mxu0
        %953 = vdwg.mxu0
        %954 = vmatprep.subr.mxu0 0.0
        %955 = vmatpush1.msra.mxu0 %v420
        %956 = vmatprep.subr.mxu0 0.0
        %957 = vmatpush1.msra.mxu0 %v421
        %958 = vmatprep.subr.mxu0 0.0
        %959 = vmatpush1.msra.mxu0 %v422
        %960 = vmatprep.subr.mxu0 0.0
        %961 = vmatpush1.msra.mxu0 %v423
        %962 = vmatprep.subr.mxu0 0.0
        %963 = vmatpush1.msra.mxu0 %v424
        %964 = vmatprep.subr.mxu0 0.0
        %965 = vmatpush1.msra.mxu0 %v425
        %966 = vmatprep.subr.mxu0 0.0
        %967 = vmatpush1.msra.mxu0 %v426
        %968 = vmatprep.subr.mxu0 0.0
        %969 = vmatpush1.msra.mxu0 %v427
        %970 = vmatprep.subr.mxu0 0.0
        %971 = vmatpush1.msra.mxu0 %v428
        %972 = vmatprep.subr.mxu0 0.0
        %973 = vmatpush1.msra.mxu0 %v429
        %974 = vmatprep.subr.mxu0 0.0
        %975 = vmatpush1.msra.mxu0 %v430
        %976 = vmatprep.subr.mxu0 0.0
        %977 = vmatpush1.msra.mxu0 %v431
        %978 = vmatprep.subr.mxu0 0.0
        %979 = vmatpush1.msra.mxu0 %v432
        %980 = vmatprep.subr.mxu0 0.0
        %981 = vmatpush1.msra.mxu0 %v433
        %982 = vmatprep.subr.mxu0 0.0
        %983 = vmatpush1.msra.mxu0 %v434
        %984 = vmatprep.subr.mxu0 0.0
        %985 = vmatpush1.msra.mxu0 %v435
        %986 = vmatprep.subr.mxu0 0.0
        %987 = vmatpush1.msra.mxu0 %v436
        %988 = vmatprep.subr.mxu0 0.0
        %989 = vmatpush1.msra.mxu0 %v437
        %990 = vmatprep.subr.mxu0 0.0
        %991 = vmatpush1.msra.mxu0 %v438
        %992 = vmatprep.subr.mxu0 0.0
        %993 = vmatpush1.msra.mxu0 %v439
        %994 = vmatprep.subr.mxu0 0.0
        %995 = vmatpush1.msra.mxu0 %v440
        %996 = vmatprep.subr.mxu0 0.0
        %997 = vmatpush1.msra.mxu0 %v441
        %998 = vmatprep.subr.mxu0 0.0
        %999 = vmatpush1.msra.mxu0 %v442
        %1000 = vmatprep.subr.mxu0 0.0
        %1001 = vmatpush1.msra.mxu0 %v443
        %1002 = vmatprep.subr.mxu0 0.0
        %1003 = vmatpush1.msra.mxu0 %v444
        %1004 = vmatprep.subr.mxu0 0.0
        %1005 = vmatpush1.msra.mxu0 %v445
        %1006 = vmatprep.subr.mxu0 0.0
        %1007 = vmatpush1.msra.mxu0 %v446
        %1008 = vmatprep.subr.mxu0 0.0
        %1009 = vmatpush1.msra.mxu0 %v447
        %1010 = vmatprep.subr.mxu0 0.0
        %1011 = vmatpush1.msra.mxu0 %v448
        %1012 = vmatprep.subr.mxu0 0.0
        %1013 = vmatpush1.msra.mxu0 %v449
        %1014 = vmatprep.subr.mxu0 0.0
        %1015 = vmatpush1.msra.mxu0 %v450
        %1016 = vmatprep.subr.mxu0 0.0
        %1017 = vmatpush1.msra.mxu0 %v451
        %1018 = vmatprep.mubr.f32.mxu0 %v570
        %1019 = vmatmul.mubr.f32.gmra.mrb[0].mxu0 %v568
        %v1020 = vpop.f32.mrb[0].mxu0
        %v1021 = vadd.f32 %v951, %v1020
        %v1022 = vpop.f32.mrb[0].mxu0
        %1023 = vdwg.mxu0
        %1024 = vmatprep.subr.mxu0 0.0
        %1025 = vmatpush1.msra.mxu0 %v452
        %1026 = vmatprep.subr.mxu0 0.0
        %1027 = vmatpush1.msra.mxu0 %v453
        %1028 = vmatprep.subr.mxu0 0.0
        %1029 = vmatpush1.msra.mxu0 %v454
        %1030 = vmatprep.subr.mxu0 0.0
        %1031 = vmatpush1.msra.mxu0 %v455
        %1032 = vmatprep.subr.mxu0 0.0
        %1033 = vmatpush1.msra.mxu0 %v456
        %1034 = vmatprep.subr.mxu0 0.0
        %1035 = vmatpush1.msra.mxu0 %v457
        %1036 = vmatprep.subr.mxu0 0.0
        %1037 = vmatpush1.msra.mxu0 %v458
        %1038 = vmatprep.subr.mxu0 0.0
        %1039 = vmatpush1.msra.mxu0 %v459
        %1040 = vmatprep.subr.mxu0 0.0
        %1041 = vmatpush1.msra.mxu0 %v460
        %1042 = vmatprep.subr.mxu0 0.0
        %1043 = vmatpush1.msra.mxu0 %v461
        %1044 = vmatprep.subr.mxu0 0.0
        %1045 = vmatpush1.msra.mxu0 %v462
        %1046 = vmatprep.subr.mxu0 0.0
        %1047 = vmatpush1.msra.mxu0 %v463
        %1048 = vmatprep.subr.mxu0 0.0
        %1049 = vmatpush1.msra.mxu0 %v464
        %1050 = vmatprep.subr.mxu0 0.0
        %1051 = vmatpush1.msra.mxu0 %v465
        %1052 = vmatprep.subr.mxu0 0.0
        %1053 = vmatpush1.msra.mxu0 %v466
        %1054 = vmatprep.subr.mxu0 0.0
        %1055 = vmatpush1.msra.mxu0 %v467
        %1056 = vmatprep.subr.mxu0 0.0
        %1057 = vmatpush1.msra.mxu0 %v468
        %1058 = vmatprep.subr.mxu0 0.0
        %1059 = vmatpush1.msra.mxu0 %v469
        %1060 = vmatprep.subr.mxu0 0.0
        %1061 = vmatpush1.msra.mxu0 %v470
        %1062 = vmatprep.subr.mxu0 0.0
        %1063 = vmatpush1.msra.mxu0 %v471
        %1064 = vmatprep.subr.mxu0 0.0
        %1065 = vmatpush1.msra.mxu0 %v472
        %1066 = vmatprep.subr.mxu0 0.0
        %1067 = vmatpush1.msra.mxu0 %v473
        %1068 = vmatprep.subr.mxu0 0.0
        %1069 = vmatpush1.msra.mxu0 %v474
        %1070 = vmatprep.subr.mxu0 0.0
        %1071 = vmatpush1.msra.mxu0 %v475
        %1072 = vmatprep.subr.mxu0 0.0
        %1073 = vmatpush1.msra.mxu0 %v476
        %1074 = vmatprep.subr.mxu0 0.0
        %1075 = vmatpush1.msra.mxu0 %v477
        %1076 = vmatprep.subr.mxu0 0.0
        %1077 = vmatpush1.msra.mxu0 %v478
        %1078 = vmatprep.subr.mxu0 0.0
        %1079 = vmatpush1.msra.mxu0 %v479
        %1080 = vmatprep.subr.mxu0 0.0
        %1081 = vmatpush1.msra.mxu0 %v480
        %1082 = vmatprep.subr.mxu0 0.0
        %1083 = vmatpush1.msra.mxu0 %v481
        %1084 = vmatprep.subr.mxu0 0.0
        %1085 = vmatpush1.msra.mxu0 %v482
        %1086 = vmatprep.subr.mxu0 0.0
        %1087 = vmatpush1.msra.mxu0 %v483
        %1088 = vmatprep.mubr.f32.mxu0 %v586
        %1089 = vmatmul.mubr.f32.gmra.mrb[0].mxu0 %v578
        %v1090 = vpop.f32.mrb[0].mxu0
        %v1091 = vadd.f32 %v1021, %v1090
        %v1092 = vpop.f32.mrb[0].mxu0
        %1093 = vdwg.mxu0
        %1094 = vmatprep.subr.mxu0 0.0
        %1095 = vmatpush1.msra.mxu0 %v484
        %1096 = vmatprep.subr.mxu0 0.0
        %1097 = vmatpush1.msra.mxu0 %v485
        %1098 = vmatprep.subr.mxu0 0.0
        %1099 = vmatpush1.msra.mxu0 %v486
        %1100 = vmatprep.subr.mxu0 0.0
        %1101 = vmatpush1.msra.mxu0 %v487
        %1102 = vmatprep.subr.mxu0 0.0
        %1103 = vmatpush1.msra.mxu0 %v488
        %1104 = vmatprep.subr.mxu0 0.0
        %1105 = vmatpush1.msra.mxu0 %v489
        %1106 = vmatprep.subr.mxu0 0.0
        %1107 = vmatpush1.msra.mxu0 %v490
        %1108 = vmatprep.subr.mxu0 0.0
        %1109 = vmatpush1.msra.mxu0 %v491
        %1110 = vmatprep.subr.mxu0 0.0
        %1111 = vmatpush1.msra.mxu0 %v492
        %1112 = vmatprep.subr.mxu0 0.0
        %1113 = vmatpush1.msra.mxu0 %v493
        %1114 = vmatprep.subr.mxu0 0.0
        %1115 = vmatpush1.msra.mxu0 %v494
        %1116 = vmatprep.subr.mxu0 0.0
        %1117 = vmatpush1.msra.mxu0 %v495
        %1118 = vmatprep.subr.mxu0 0.0
        %1119 = vmatpush1.msra.mxu0 %v496
        %1120 = vmatprep.subr.mxu0 0.0
        %1121 = vmatpush1.msra.mxu0 %v497
        %1122 = vmatprep.subr.mxu0 0.0
        %1123 = vmatpush1.msra.mxu0 %v498
        %1124 = vmatprep.subr.mxu0 0.0
        %1125 = vmatpush1.msra.mxu0 %v499
        %1126 = vmatprep.subr.mxu0 0.0
        %1127 = vmatpush1.msra.mxu0 %v500
        %1128 = vmatprep.subr.mxu0 0.0
        %1129 = vmatpush1.msra.mxu0 %v501
        %1130 = vmatprep.subr.mxu0 0.0
        %1131 = vmatpush1.msra.mxu0 %v502
        %1132 = vmatprep.subr.mxu0 0.0
        %1133 = vmatpush1.msra.mxu0 %v503
        %1134 = vmatprep.subr.mxu0 0.0
        %1135 = vmatpush1.msra.mxu0 %v504
        %1136 = vmatprep.subr.mxu0 0.0
        %1137 = vmatpush1.msra.mxu0 %v505
        %1138 = vmatprep.subr.mxu0 0.0
        %1139 = vmatpush1.msra.mxu0 %v506
        %1140 = vmatprep.subr.mxu0 0.0
        %1141 = vmatpush1.msra.mxu0 %v507
        %1142 = vmatprep.subr.mxu0 0.0
        %1143 = vmatpush1.msra.mxu0 %v508
        %1144 = vmatprep.subr.mxu0 0.0
        %1145 = vmatpush1.msra.mxu0 %v509
        %1146 = vmatprep.subr.mxu0 0.0
        %1147 = vmatpush1.msra.mxu0 %v510
        %1148 = vmatprep.subr.mxu0 0.0
        %1149 = vmatpush1.msra.mxu0 %v511
        %1150 = vmatprep.subr.mxu0 0.0
        %1151 = vmatpush1.msra.mxu0 %v512
        %1152 = vmatprep.subr.mxu0 0.0
        %1153 = vmatpush1.msra.mxu0 %v513
        %1154 = vmatprep.subr.mxu0 0.0
        %1155 = vmatpush1.msra.mxu0 %v514
        %1156 = vmatprep.subr.mxu0 0.0
        %1157 = vmatpush1.msra.mxu0 %v515
        %1158 = vmatprep.mubr.f32.mxu0 %v587
        %1159 = vmatmul.mubr.f32.gmra.mrb[0].mxu0 %v585
        %v1160 = vpop.f32.mrb[0].mxu0
        %v1161 = vadd.f32 %v1091, %v1160
        %v1162 = vpop.f32.mrb[0].mxu0
        %1163 = vdwg.mxu0
        %v1164 = vadd.f32 %v255, %v1161
        %1165 = vst [vmem:[#allocation2] sm:$0x3] %v1164
        %p1166 = scmp.eq.s32.totalorder %s26, 3
        // Predicated region
        $region49: #{tpu_custom_call.1} parent=31 // pred_check
          %p1167 = pneg %p1166
        $region50: #{tpu_custom_call.1} parent=31 // pred_check_branch
          %1169 = sbr.rel (%p1167) target = $region52
        $region51: #{tpu_custom_call.1} parent=31 // pred_region
          %v1170 = vld [vmem:[#allocation2] sm:$0x3]
          %v1171 = vld [vmem:[#allocation8] sm:$0x1]
          %v1173 = vlaneseq
          %v1174 = vshrl.u32 %v1173, 7
          %v1175 = vsub.s32 0, %v1174
          %v1176 = vrot.slane %v1171, %v1175
          %v1178 = vadd.f32 %v1170, %v1176
          %1179 = vst [vmem:[#allocation9] sm:$0x3] %v1178
        $region52: #{tpu_custom_call.1} parent=31 // pred_fallthru
          _
        // Predicated region
        $region53: #{tpu_custom_call.1} parent=31 // pred_check
          %p1180 = pneg %p126
        $region54: #{tpu_custom_call.1} parent=31 // pred_check_branch
          %1182 = sbr.rel (%p1180) target = $region56
        $region55: #{tpu_custom_call.1} parent=31 // pred_region
          %s1184 = ssub.s32 32, 32
          %1185 = vsyncadd [#allocation5], %s1184
          %s1186 = smul.addr %s25, 32
          %s1187 = scalar_lea.hbm %s3, %s1186
          %s1189 = sshll.u32 [#allocation9], 4
          %s1190 = int_to_ptr.vmem [resolvable:$true] %s1189
          %1192 = dma.vmem_to_hbm [thread:$0]  %s1190, 32, %s1187, [#allocation5]
        $region56: #{tpu_custom_call.1} parent=31 // pred_fallthru
          _
        // Predicated region
        $region57: #{tpu_custom_call.1} parent=31 // pred_check
          %p1193 = pneg %p126
        $region58: #{tpu_custom_call.1} parent=31 // pred_check_branch
          %1195 = sbr.rel (%p1193) target = $region60
        $region59: #{tpu_custom_call.1} parent=31 // pred_region
          %1196 = dma.done [#allocation5], 32
        $region60: #{tpu_custom_call.1} parent=31 // pred_fallthru
          _
      $region32: #{tpu_custom_call.1} parent=5 // pred_fallthru
        _
      %p1197 = scmp.le.s32.totalorder 2, %s16
      // Predicated region
      $region61: #{tpu_custom_call.1} parent=5 // pred_check
        %p1198 = pneg %p1197
      $region62: #{tpu_custom_call.1} parent=5 // pred_check_branch
        %1200 = sbr.rel (%p1198) target = $region64
      $region63: #{tpu_custom_call.1} parent=5 // pred_region
        %s1201 = ssub.s32 %s16, 2
      $region64: #{tpu_custom_call.1} parent=5 // pred_fallthru
        _
    $region6: #{tpu_custom_call.1} parent=1 // loop_footer
      %s20 = sadd.s32 1, %s16
    $region7: #{tpu_custom_call.1} parent=1 // loop_footer_branch
      %15 = sbr.rel target = $region3
    $region8: #{tpu_custom_call.1} parent=1 // loop_exit
      _
    %1202 = vsyncpa [#allocation4], 1
    %s1203 = scalar_lea.sflag [#allocation4], 1
    %1204 = vsyncpa %s1203, 1
    %1205 = vsyncpa [#allocation7], 1
    %s1206 = scalar_lea.sflag [#allocation7], 1
    %1207 = vsyncpa %s1206, 1
    %1208 = vsyncpa [#allocation5], 1
    %s1209 = scalar_lea.sflag [#allocation5], 1
    %1210 = vsyncpa %s1209, 1

</llo_original>
